<compile_context>
chip_gen: v6e
topology: v6e:2x2x1
jax: 0.10.0
libtpu: 0.0.40
codegen_flags: <defaults>
</compile_context>

<pallas_src>
import functools

import jax
import jax.numpy as jnp
from jax.experimental import pallas as pl
from jax.experimental.pallas import tpu as pltpu

_TARGET_BLOCK_BYTES = 2 << 20   # ~2 MiB per VMEM block (review: 2-4 MiB)
_VMEM_LIMIT_BYTES = 32 << 20    # explicit: > v5e's 16 MiB default scoped
                                # limit, well under v7x's 64 MiB physical VMEM


def _copy_kernel(x_ref, o_ref):
    # Whole-tile dense copy: unmasked vld/vst, nothing else.
    o_ref[...] = x_ref[...]


def _choose_lane_tile(start, length, n_rows, itemsize,
                      target_bytes=_TARGET_BLOCK_BYTES):
    """Pick lane-tile T (multiple of 128) for a contiguous slab copy.

    Constraints:
      * T | start (caller guarantees start is 128-aligned), so the input
        index_map addresses the slab in whole block units.
      * n_rows * T * itemsize <= target_bytes (block fits VMEM budget).
      * T < length when possible, so the 1-D grid has >= 2 steps and both
        v7x TensorCores get work (single-TC v5e/v6e unaffected).
    Prefers a T that also divides `length` (no masked tail block); otherwise
    the ragged tail is handled by the cdiv grid + masked boundary block.
    """
    per_row = max(1, target_bytes // (n_rows * itemsize))
    limit = max(128, (per_row // 128) * 128)
    limit = min(limit, max(128, (length // 128) * 128))
    if length > 128:  # prefer >= 2 grid steps
        limit = min(limit, max(128, ((length - 1) // 128) * 128))
    # Pass 1: largest 128-multiple dividing both start and length.
    for t in range(limit, 127, -128):
        if ((start % t == 0) if start else True) and (length % t == 0):
            return t
    # Pass 2: largest 128-multiple dividing start (tail block masked).
    for t in range(limit, 127, -128):
        if (start % t == 0) if start else True:
            return t
    return 128


def _copy_slab(x_flat, start, length):
    """pallas_call copying x_flat[:, start:start+length] into a new array."""
    n_rows, _ = x_flat.shape
    itemsize = jnp.dtype(x_flat.dtype).itemsize
    tile = _choose_lane_tile(start, length, n_rows, itemsize)
    col0 = start // tile  # exact by construction of `tile`
    grid = (pl.cdiv(length, tile),)
    return pl.pallas_call(
        _copy_kernel,
        out_shape=jax.ShapeDtypeStruct((n_rows, length), x_flat.dtype),
        grid=grid,
        in_specs=[pl.BlockSpec((n_rows, tile), lambda t: (0, col0 + t))],
        out_specs=pl.BlockSpec((n_rows, tile), lambda t: (0, t)),
        compiler_params=pltpu.CompilerParams(
            dimension_semantics=("parallel",),
            vmem_limit_bytes=_VMEM_LIMIT_BYTES),
    )(x_flat)


def _split_channels_kernel(x_ref, o1_ref, o2_ref, *, c):
    # x_ref: (1, C, T) VMEM tile; static channel slices -> whole-slab stores.
    o1_ref[...] = x_ref[:, :c, :]
    o2_ref[...] = x_ref[:, c:, :]


def _split_channel_tiled(x3, c):
    """Fallback for shapes where c*H*W is not 128-aligned: (N, C, T) blocks
    with the channel split done in-core (sublane slice), cdiv-tiled lanes."""
    n, C, hw = x3.shape
    itemsize = jnp.dtype(x3.dtype).itemsize
    if hw < 128:
        tile = hw  # full lane extent: always legal
    else:
        cap = max(128, (_TARGET_BLOCK_BYTES // (C * itemsize)) // 128 * 128)
        tile = min(cap, (hw // 128) * 128)
    grid = (n, pl.cdiv(hw, tile))
    return pl.pallas_call(
        functools.partial(_split_channels_kernel, c=c),
        out_shape=(jax.ShapeDtypeStruct((n, c, hw), x3.dtype),
                   jax.ShapeDtypeStruct((n, C - c, hw), x3.dtype)),
        grid=grid,
        in_specs=[pl.BlockSpec((1, C, tile), lambda i, t: (i, 0, t))],
        out_specs=(pl.BlockSpec((1, c, tile), lambda i, t: (i, 0, t)),
                   pl.BlockSpec((1, C - c, tile), lambda i, t: (i, 0, t))),
        compiler_params=pltpu.CompilerParams(
            dimension_semantics=("parallel", "parallel"),
            vmem_limit_bytes=_VMEM_LIMIT_BYTES),
    )(x3)


def split_block(x, ratio=0.5):
    """Channel split matching torch SplitBlock.forward on NCHW input."""
    N, C, H, W = x.shape
    c = int(C * ratio)
    assert 0 < c < C, "ratio must split channels into two non-empty groups"
    hw = H * W
    L1, L2 = c * hw, (C - c) * hw

    if L1 % 128 == 0 and L2 >= 128:
        # Contiguous per-batch slabs: out1 = x_flat[:, :L1], out2 = rest.
        x_flat = x.reshape(N, C * hw)  # free row-major reshape (no copy)
        out1 = _copy_slab(x_flat, 0, L1)
        out2 = _copy_slab(x_flat, L1, L2)
    else:
        # Alignment-constrained shapes: channel-sliced tiled path.
        out1, out2 = _split_channel_tiled(x.reshape(N, C, hw), c)

    return out1.reshape(N, c, H, W), out2.reshape(N, C - c, H, W)


def split_block_ref(x, ratio=0.5):
    # Pure-JAX reference mirroring the PyTorch slicing.
    c = int(x.shape[1] * ratio)
    return x[:, :c, :, :], x[:, c:, :, :]


if __name__ == "__main__":
    key = jax.random.PRNGKey(0)
    N, C, H, W = 2, 4, 16, 16
    ratio = 0.5
    x = jax.random.normal(key, (N, C, H, W), dtype=jnp.float32)

    y1, y2 = split_block(x, ratio=ratio)
    y1 = jax.block_until_ready(y1)
    y2 = jax.block_until_ready(y2)

    r1, r2 = split_block_ref(x, ratio=ratio)
    c = int(C * ratio)
    assert y1.shape == (N, c, H, W) and y2.shape == (N, C - c, H, W)
    assert y1.dtype == x.dtype and y2.dtype == x.dtype
    assert jnp.array_equal(y1, r1), "mismatch in first split half"
    assert jnp.array_equal(y2, r2), "mismatch in second split half"

    print("KERNEL_OK")
</pallas_src>

<mosaic_0001>
module attributes {stable_mosaic.version = 11 : i64} {
  func.func @_copy_kernel(%arg0: i32, %arg1: memref<2x256xf32, #tpu.memory_space<vmem>>, %arg2: memref<2x256xf32, #tpu.memory_space<vmem>>) attributes {dimension_semantics = [#tpu.dimension_semantics<parallel>], iteration_bounds = array<i64: 2>, scalar_prefetch = 0 : i64, scratch_operands = 0 : i64, tpu.core_type = #tpu.core_type<tc>, window_params = [{transform_indices = @transform_0, window_bounds = array<i64: 2, 256>}, {transform_indices = @transform_1, window_bounds = array<i64: 2, 256>}]} {
    %c0 = arith.constant 0 : index
    %c0_0 = arith.constant 0 : index
    %0 = vector.load %arg1[%c0, %c0_0] : memref<2x256xf32, #tpu.memory_space<vmem>>, vector<2x256xf32>
    %c0_1 = arith.constant 0 : index
    %c0_2 = arith.constant 0 : index
    %1 = vector.load %arg2[%c0_1, %c0_2] : memref<2x256xf32, #tpu.memory_space<vmem>>, vector<2x256xf32>
    tpu.vector_store %arg2[%c0_1, %c0_2], %0 {strides = array<i32>} : memref<2x256xf32, #tpu.memory_space<vmem>>, vector<2x256xf32>,
    return
  }
  func.func @transform_0(%arg0: i32) -> (i32, i32) {
    %c0_i32 = arith.constant 0 : i32
    %0 = arith.addi %c0_i32, %arg0 : i32
    %c0_i32_0 = arith.constant 0 : i32
    %c0_i32_1 = arith.constant 0 : i32
    return %c0_i32_0, %0 : i32, i32
  }
  func.func @transform_1(%arg0: i32) -> (i32, i32) {
    %c0_i32 = arith.constant 0 : i32
    %c0_i32_0 = arith.constant 0 : i32
    return %c0_i32, %arg0 : i32, i32
  }
}

</mosaic_0001>

<llo_original>
// kernel: tpu_custom_call.1
$region0: #{tpu_custom_call.1}
  #allocation0 [shape = 'u32[]', space=smem, size = 0x4, offset = 0x4, fixed_abs, tag = 'smem constant byte address 0x4 - core index']
  #allocation1 [shape = 'u32[144,128]{1,0:T(1,128)}', space=vmem, size = 0x12000, scoped, tag = 'internal scratch']
  %s0 = inlined_call_operand.hbm [shape: f32[2,1024], index: 0, kind: input, shape index: {}]
  %s1 = inlined_call_operand.hbm [shape: f32[2,512], index: 1, kind: output, shape index: {}]
  %s2 = sld [smem:[#allocation0]]
  $region41: #{tpu_custom_call.1} parent=0
    _
  %s4 = ssub.s32 1, %s2
  %s5 = scalar_select 0, %s4, %s2
  $region1: #{tpu_custom_call.1} parent=0
    #allocation2 [shape = 'u8[4096]{0}', space=vmem, size = 0x1000, scoped, tag = 'input window, operand 0']
    #allocation3 [shape = 's32[2]{0}', space=sflag, size = 0x8, scoped, tag = 'scoped memory for tpu_custom_call.1']
    #allocation4 [shape = 's32[2]{0}', space=sflag, size = 0x8, scoped, tag = 'scoped memory for tpu_custom_call.1']
    #allocation5 [shape = 'u8[4096]{0}', space=vmem, size = 0x1000, scoped, tag = 'output window, operand 0']
    %6 = vsyncpa [#allocation3], 0
    %s7 = scalar_lea.sflag [#allocation3], 1
    %8 = vsyncpa %s7, 0
    %9 = vsyncpa [#allocation4], 0
    %s10 = scalar_lea.sflag [#allocation4], 1
    %11 = vsyncpa %s10, 0
    loop: start=0, step=1, limit=4
    $region2: #{tpu_custom_call.1} parent=1 // loop_pre_header
      _
    $region3: #{tpu_custom_call.1} parent=1 // loop_header
      %s13 = sphi 0, %s17
      %p14 = scmp.ge.s32.totalorder %s13, 4
      %s23 = sphi 0, %s25
      %s26 = sphi 0, %s23
      %s27 = sphi 0, %s26
      %s43 = sphi 0, %s27
      %s49 = sphi 0, %s51
      %s52 = sphi 0, %s49
      %s53 = sphi 0, %s52
      %s69 = sphi 0, %s53
    $region4: #{tpu_custom_call.1} parent=1 // loop_header_branch
      %16 = sbr.rel (%p14) target = $region8
    $region5: #{tpu_custom_call.1} parent=1 // loop_body
      %s18 = ssub.s32 %s13, 1
      %s19 = ssub.s32 %s13, 2
      %s20 = sadd.s32 %s13, 1
      %s21 = ssub.s32 %s13, %s20
      %p22 = scmp.eq.s32.totalorder %s21, 0
      %s24 = sadd.s32 %s23, 1
      %s25 = scalar_select %p22, %s23, %s24
      %p28 = pneg %p22
      %p29 = scmp.eq.s32.totalorder %s13, 1
      %p30 = por %p28, %p29
      %p31 = scmp.ne.s32.totalorder %s23, %s26
      %p32 = scmp.eq.s32.totalorder %s13, 0
      %p33 = por %p31, %p32
      %p34 = scmp.ne.s32.totalorder %s23, %s26
      %p35 = scmp.eq.s32.totalorder %s18, 1
      %p36 = por %p34, %p35
      %p37 = scmp.ne.s32.totalorder %s26, %s27
      %p38 = scmp.eq.s32.totalorder %s18, 0
      %p39 = por %p37, %p38
      %p40 = scmp.ne.s32.totalorder %s26, %s27
      %p41 = scmp.eq.s32.totalorder %s19, 1
      %p42 = por %p40, %p41
      %p44 = scmp.ne.s32.totalorder %s27, %s43
      %p45 = scmp.eq.s32.totalorder %s19, 0
      %p46 = por %p44, %p45
      %s47 = ssub.s32 %s13, %s20
      %p48 = scmp.eq.s32.totalorder %s47, 0
      %s50 = sadd.s32 %s49, 1
      %s51 = scalar_select %p48, %s49, %s50
      %p54 = pneg %p48
      %p55 = scmp.eq.s32.totalorder %s13, 1
      %p56 = por %p54, %p55
      %p57 = scmp.ne.s32.totalorder %s49, %s52
      %p58 = scmp.eq.s32.totalorder %s13, 0
      %p59 = por %p57, %p58
      %p60 = scmp.ne.s32.totalorder %s49, %s52
      %p61 = scmp.eq.s32.totalorder %s18, 1
      %p62 = por %p60, %p61
      %p63 = scmp.ne.s32.totalorder %s52, %s53
      %p64 = scmp.eq.s32.totalorder %s18, 0
      %p65 = por %p63, %p64
      %p66 = scmp.ne.s32.totalorder %s52, %s53
      %p67 = scmp.eq.s32.totalorder %s19, 1
      %p68 = por %p66, %p67
      %p70 = scmp.ne.s32.totalorder %s53, %s69
      %p71 = scmp.eq.s32.totalorder %s19, 0
      %p72 = por %p70, %p71
      %p73 = scmp.le.s32.totalorder 1, %s13
      %p74 = scmp.lt.s32.totalorder %s13, 3
      %p75 = pnand %p73, %p74
      %p76 = pneg %p75
      // Predicated region
      $region9: #{tpu_custom_call.1} parent=5 // pred_check
        _
      $region10: #{tpu_custom_call.1} parent=5 // pred_check_branch
        %78 = sbr.rel (%p75) target = $region12
      $region11: #{tpu_custom_call.1} parent=5 // pred_region
        %s79 = ssub.s32 %s13, 1
      $region12: #{tpu_custom_call.1} parent=5 // pred_fallthru
        _
      %p80 = scmp.lt.s32.totalorder %s13, 2
      // Predicated region
      $region13: #{tpu_custom_call.1} parent=5 // pred_check
        %p81 = pneg %p80
      $region14: #{tpu_custom_call.1} parent=5 // pred_check_branch
        %83 = sbr.rel (%p81) target = $region16
      $region15: #{tpu_custom_call.1} parent=5 // pred_region
        // Predicated region
        $region17: #{tpu_custom_call.1} parent=15 // pred_check
          %p84 = pneg %p33
        $region18: #{tpu_custom_call.1} parent=15 // pred_check_branch
          %86 = sbr.rel (%p84) target = $region20
        $region19: #{tpu_custom_call.1} parent=15 // pred_region
          %s87 = sand.u32 %s23, 1
          %s88 = scalar_lea.sflag [#allocation3], %s87
          %s89 = sand.u32 %s23, 1
          %s90 = smul.addr %s89, 4
          %s91 = scalar_lea.vmem [#allocation2], %s90
          %s92 = smul.u32 2, %s13
          %s94 = ssub.s32 64, 64
          %95 = vsyncadd %s88, %s94
          %s96 = smul.addr %s92, 32
          %s97 = scalar_lea.hbm %s0, %s96
          %s99 = sshll.u32 %s91, 4
          %s100 = int_to_ptr.vmem [resolvable:$true] %s99
          %102 = dma.hbm_to_vmem [thread:$0]  %s97, 64, %s100, %s88
        $region20: #{tpu_custom_call.1} parent=15 // pred_fallthru
          _
      $region16: #{tpu_custom_call.1} parent=5 // pred_fallthru
        _
      %p103 = scmp.le.s32.totalorder 1, %s13
      %p104 = scmp.lt.s32.totalorder %s13, 3
      %p105 = pnand %p103, %p104
      %p106 = pneg %p105
      // Predicated region
      $region21: #{tpu_custom_call.1} parent=5 // pred_check
        _
      $region22: #{tpu_custom_call.1} parent=5 // pred_check_branch
        %108 = sbr.rel (%p105) target = $region24
      $region23: #{tpu_custom_call.1} parent=5 // pred_region
        %s109 = ssub.s32 %s13, 1
        %s110 = sand.u32 %s26, 1
        %s111 = scalar_lea.sflag [#allocation3], %s110
        %s112 = sand.u32 %s26, 1
        %s113 = smul.addr %s112, 4
        %s114 = scalar_lea.vmem [#allocation2], %s113
        // Predicated region
        $region25: #{tpu_custom_call.1} parent=23 // pred_check
          %p115 = pneg %p39
        $region26: #{tpu_custom_call.1} parent=23 // pred_check_branch
          %117 = sbr.rel (%p115) target = $region28
        $region27: #{tpu_custom_call.1} parent=23 // pred_region
          %118 = dma.done %s111, 64
        $region28: #{tpu_custom_call.1} parent=23 // pred_fallthru
          _
        %s119 = sand.u32 %s26, 1
        %s120 = scalar_lea.sflag [#allocation3], %s119
        %s121 = sand.u32 %s26, 1
        %s122 = smul.addr %s121, 4
        %s123 = scalar_lea.vmem [#allocation2], %s122
        %p124 = pneg %p39
        %p125 = pneg %p36
        %p126 = pneg %p65
        %p127 = pneg %p62
        %s128 = sand.u32 %s52, 1
        %s129 = scalar_lea.sflag [#allocation4], %s128
        %s130 = sand.u32 %s52, 1
        %s131 = smul.addr %s130, 4
        %s132 = scalar_lea.vmem [#allocation5], %s131
        %s133 = smul.u32 2, %s18
        %s134 = smul.u32 2, %s18
        %v135 = vld [vmem:[%s114] sm:$0xf]
        %136 = vst [vmem:[%s132] sm:$0xf] %v135
        %s137 = sand.u32 %s52, 1
        %s138 = scalar_lea.sflag [#allocation4], %s137
        %s139 = sand.u32 %s52, 1
        %s140 = smul.addr %s139, 4
        %s141 = scalar_lea.vmem [#allocation5], %s140
        // Predicated region
        $region29: #{tpu_custom_call.1} parent=23 // pred_check
          %p142 = pneg %p62
        $region30: #{tpu_custom_call.1} parent=23 // pred_check_branch
          %144 = sbr.rel (%p142) target = $region32
        $region31: #{tpu_custom_call.1} parent=23 // pred_region
          %s145 = smul.u32 2, %s18
          %s147 = ssub.s32 64, 64
          %148 = vsyncadd %s138, %s147
          %s149 = smul.addr %s145, 32
          %s150 = scalar_lea.hbm %s1, %s149
          %s152 = sshll.u32 %s141, 4
          %s153 = int_to_ptr.vmem [resolvable:$true] %s152
          %155 = dma.vmem_to_hbm [thread:$0]  %s153, 64, %s150, %s138
        $region32: #{tpu_custom_call.1} parent=23 // pred_fallthru
          _
      $region24: #{tpu_custom_call.1} parent=5 // pred_fallthru
        _
      %p156 = scmp.le.s32.totalorder 2, %s13
      // Predicated region
      $region33: #{tpu_custom_call.1} parent=5 // pred_check
        %p157 = pneg %p156
      $region34: #{tpu_custom_call.1} parent=5 // pred_check_branch
        %159 = sbr.rel (%p157) target = $region36
      $region35: #{tpu_custom_call.1} parent=5 // pred_region
        %s160 = ssub.s32 %s13, 2
        // Predicated region
        $region37: #{tpu_custom_call.1} parent=35 // pred_check
          %p161 = pneg %p68
        $region38: #{tpu_custom_call.1} parent=35 // pred_check_branch
          %163 = sbr.rel (%p161) target = $region40
        $region39: #{tpu_custom_call.1} parent=35 // pred_region
          %s164 = sand.u32 %s53, 1
          %s165 = scalar_lea.sflag [#allocation4], %s164
          %s166 = sand.u32 %s53, 1
          %s167 = smul.addr %s166, 4
          %s168 = scalar_lea.vmem [#allocation5], %s167
          %169 = dma.done %s165, 64
        $region40: #{tpu_custom_call.1} parent=35 // pred_fallthru
          _
      $region36: #{tpu_custom_call.1} parent=5 // pred_fallthru
        _
    $region6: #{tpu_custom_call.1} parent=1 // loop_footer
      %s17 = sadd.s32 1, %s13
    $region7: #{tpu_custom_call.1} parent=1 // loop_footer_branch
      %12 = sbr.rel target = $region3
    $region8: #{tpu_custom_call.1} parent=1 // loop_exit
      _
    %170 = vsyncpa [#allocation3], 1
    %s171 = scalar_lea.sflag [#allocation3], 1
    %172 = vsyncpa %s171, 1
    %173 = vsyncpa [#allocation4], 1
    %s174 = scalar_lea.sflag [#allocation4], 1
    %175 = vsyncpa %s174, 1

</llo_original>
